<compile_context>
chip_gen: v7x
topology: tpu7x:2x2x1
jax: 0.10.0
libtpu: 0.0.40
codegen_flags: <defaults>
</compile_context>

<pallas_src>
import functools

import jax
import jax.numpy as jnp
from jax.experimental import pallas as pl
from jax.experimental.pallas import tpu as pltpu


def _triplet_colbert_kernel(a_ref, p_ref, n_ref, o_ref, *, margin, use_bf16):
    """One batch block of the ColBERT triplet loss.

    a_ref: (TB, N, D)   anchor tokens
    p_ref: (TB, M, D)   positive doc tokens
    n_ref: (TB, M, D)   negative doc tokens
    o_ref: (TB, 128)    per-batch hinge loss, replicated across lanes
    """
    a = a_ref[...]
    p = p_ref[...]
    n = n_ref[...]
    if use_bf16:
        a = a.astype(jnp.bfloat16)
        p = p.astype(jnp.bfloat16)
        n = n.astype(jnp.bfloat16)

    # Batched NT-form contractions on the MXU (contract on D), f32 accumulation.
    sim_p = jnp.einsum('bnd,bmd->bnm', a, p, preferred_element_type=jnp.float32)
    sim_n = jnp.einsum('bnd,bmd->bnm', a, n, preferred_element_type=jnp.float32)

    # ColBERT score: per-anchor-token max over doc tokens, summed over anchor
    # tokens.  No masking needed: blocks span the full logical token extents,
    # so Mosaic's reductions see the true bounds.
    pos_score = jnp.sum(jnp.max(sim_p, axis=-1), axis=-1, keepdims=True)   # (TB, 1)
    neg_score = jnp.sum(jnp.max(sim_n, axis=-1), axis=-1, keepdims=True)   # (TB, 1)

    loss = jnp.maximum(neg_score - pos_score + margin, 0.0)                # (TB, 1)

    # Lane-dense, unmasked (TB, 128) store.
    o_ref[...] = jnp.broadcast_to(loss, o_ref.shape).astype(o_ref.dtype)


def _round_up(x, m):
    return -(-x // m) * m


def _vmem_capacity_bytes():
    try:
        info = pltpu.get_tpu_info()
        cap = int(getattr(info, "vmem_capacity_bytes", 0) or 0)
        if cap > 0:
            return cap
    except Exception:
        pass
    return 64 * 1024 * 1024        # v7x-safe fallback


def triplet_colbert_loss(anchor, positive, negative, margin=0.2, *,
                         block_b=32, use_bf16=True):
    """Pallas TPU implementation of TripletColbertLoss.forward.

    anchor:   (B, N, D)
    positive: (B, M, D)
    negative: (B, M, D)
    returns:  scalar f32 = mean_b relu(colbert(a, n) - colbert(a, p) + margin)
    """
    B, N, D = anchor.shape
    assert positive.shape[0] == B and positive.shape[2] == D
    assert negative.shape == positive.shape
    M = positive.shape[1]

    itemsize = jnp.dtype(anchor.dtype).itemsize

    # ---- choose the batch block size ---------------------------------------
    if B <= block_b:
        tb = B
        # v7x has two TensorCores: give the "parallel" grid axis >= 2 steps
        # whenever that costs no batch padding.
        if B >= 16 and B % 16 == 0:
            tb = B // 2
    else:
        tb = max(8, (int(block_b) // 8) * 8)   # multiple of 8 for multi-step grids

    # ---- VMEM sizing (explicit, tile-padded working-set estimate) ----------
    def _pad_to(x, m):
        return _round_up(max(int(x), 1), m)

    def vmem_need(t):
        d_l = _pad_to(D, 128)                  # lane-padded feature dim
        n_s, m_s = _pad_to(N, 8), _pad_to(M, 8)
        n_l, m_l = _pad_to(N, 128), _pad_to(M, 128)
        in_b = t * (n_s + 2 * m_s) * d_l * itemsize          # pipelined inputs
        cast_b = t * (n_s + 2 * m_s) * d_l * 2 if (use_bf16 and itemsize > 2) else 0
        sim_b = 2 * t * n_s * m_l * 4                        # two f32 sim tiles
        red_b = 2 * t * n_l * 4                              # pos/neg max rows
        out_b = t * 128 * 4
        return 2 * in_b + 2 * out_b + sim_b + cast_b + red_b

    vmem_cap = _vmem_capacity_bytes()
    vmem_budget = (2 * vmem_cap) // 3          # leave compiler headroom
    while tb > 8 and vmem_need(tb) > vmem_budget:
        tb = max(8, ((tb // 2 + 7) // 8) * 8)

    b_pad = _round_up(B, tb)
    a, p, n = anchor, positive, negative
    if b_pad != B:
        # Only the batch axis is ever padded (zero rows yield loss == margin
        # and are dropped before the mean); token/feature axes stay untouched,
        # so there is no extra HBM staging pass in the common case.
        pad = ((0, b_pad - B), (0, 0), (0, 0))
        a = jnp.pad(a, pad)
        p = jnp.pad(p, pad)
        n = jnp.pad(n, pad)

    grid = (b_pad // tb,)
    vmem_limit = int(min(vmem_cap,
                         max(vmem_need(tb) + vmem_need(tb) // 4 + (2 << 20),
                             8 << 20)))

    kernel = functools.partial(_triplet_colbert_kernel,
                               margin=float(margin),   # NOTE: static -> recompile on change
                               use_bf16=bool(use_bf16))

    per_batch = pl.pallas_call(
        kernel,
        out_shape=jax.ShapeDtypeStruct((b_pad, 128), jnp.float32),
        grid_spec=pltpu.PrefetchScalarGridSpec(
            num_scalar_prefetch=0,
            grid=grid,
            in_specs=[
                pl.BlockSpec((tb, N, D), lambda b: (b, 0, 0)),
                pl.BlockSpec((tb, M, D), lambda b: (b, 0, 0)),
                pl.BlockSpec((tb, M, D), lambda b: (b, 0, 0)),
            ],
            out_specs=pl.BlockSpec((tb, 128), lambda b: (b, 0)),
        ),
        compiler_params=pltpu.CompilerParams(
            dimension_semantics=("parallel",),
            vmem_limit_bytes=vmem_limit),
    )(a, p, n)

    # Mean over the real batch rows only (plain-JAX glue on a (B,) vector).
    return jnp.mean(per_batch[:B, 0])


def _reference_loss(anchor, positive, negative, margin=0.2):
    def colbert_score(x, y):
        sim = jnp.einsum('bnd,bmd->bnm', x, y,
                         precision=jax.lax.Precision.HIGHEST)
        return jnp.max(sim, axis=-1).sum(axis=-1)
    pos = colbert_score(anchor, positive)
    neg = colbert_score(anchor, negative)
    return jnp.mean(jnp.maximum(neg - pos + margin, 0.0))


def _bf16_round(x):
    return x.astype(jnp.bfloat16).astype(jnp.float32)


if __name__ == "__main__":
    key = jax.random.PRNGKey(0)
    k1, k2, k3 = jax.random.split(key, 3)

    # Test 1: tile-friendly token shapes, default bf16 MXU path (f32 accum).
    B, N, M, D = 2, 8, 8, 32
    anchor = jax.random.normal(k1, (B, N, D), dtype=jnp.float32)
    positive = jax.random.normal(k2, (B, M, D), dtype=jnp.float32)
    negative = jax.random.normal(k3, (B, M, D), dtype=jnp.float32)

    loss = jax.block_until_ready(
        triplet_colbert_loss(anchor, positive, negative, margin=0.2))
    ref = _reference_loss(_bf16_round(anchor), _bf16_round(positive),
                          _bf16_round(negative), margin=0.2)
    assert jnp.allclose(loss, ref, atol=2e-3, rtol=2e-3), (loss, ref)

    # Test 2: ragged token shapes with NO wrapper padding of N/M/D, f32 MXU
    # path.  Tolerance is loose because Mosaic's default f32 matmul may use
    # reduced-precision MXU passes; a masking/reduction bug would be O(1) off.
    B2, N2, M2, D2 = 3, 7, 5, 32
    a2 = jax.random.normal(k1, (B2, N2, D2), dtype=jnp.float32)
    p2 = jax.random.normal(k2, (B2, M2, D2), dtype=jnp.float32)
    n2 = jax.random.normal(k3, (B2, M2, D2), dtype=jnp.float32)

    loss2 = jax.block_until_ready(
        triplet_colbert_loss(a2, p2, n2, margin=0.2, use_bf16=False))
    ref2 = _reference_loss(a2, p2, n2, margin=0.2)
    assert jnp.allclose(loss2, ref2, atol=5e-2, rtol=5e-2), (loss2, ref2)

    # Test 3: batch larger than the block -> multi-step "parallel" grid plus
    # batch padding (B=10, tb=8 -> grid=(2,), 6 padded rows dropped).
    B3, N3, M3, D3 = 10, 9, 6, 64
    a3 = jax.random.normal(k1, (B3, N3, D3), dtype=jnp.float32)
    p3 = jax.random.normal(k2, (B3, M3, D3), dtype=jnp.float32)
    n3 = jax.random.normal(k3, (B3, M3, D3), dtype=jnp.float32)

    loss3 = jax.block_until_ready(
        triplet_colbert_loss(a3, p3, n3, margin=0.2, block_b=8))
    ref3 = _reference_loss(_bf16_round(a3), _bf16_round(p3), _bf16_round(n3),
                           margin=0.2)
    assert jnp.allclose(loss3, ref3, atol=2e-3, rtol=2e-3), (loss3, ref3)

    print("KERNEL_OK")
</pallas_src>

<mosaic_0001>
module attributes {stable_mosaic.version = 11 : i64} {
  func.func @_triplet_colbert_kernel(%arg0: i32, %arg1: memref<2x8x32xf32, #tpu.memory_space<vmem>>, %arg2: memref<2x8x32xf32, #tpu.memory_space<vmem>>, %arg3: memref<2x8x32xf32, #tpu.memory_space<vmem>>, %arg4: memref<2x128xf32, #tpu.memory_space<vmem>>) attributes {dimension_semantics = [#tpu.dimension_semantics<parallel>], iteration_bounds = array<i64: 1>, scalar_prefetch = 0 : i64, scratch_operands = 0 : i64, tpu.core_type = #tpu.core_type<tc>, window_params = [{transform_indices = @transform_0, window_bounds = array<i64: 2, 8, 32>}, {transform_indices = @transform_1, window_bounds = array<i64: 2, 8, 32>}, {transform_indices = @transform_2, window_bounds = array<i64: 2, 8, 32>}, {transform_indices = @transform_3, window_bounds = array<i64: 2, 128>}]} {
    %c0 = arith.constant 0 : index
    %c0_0 = arith.constant 0 : index
    %c0_1 = arith.constant 0 : index
    %0 = vector.load %arg1[%c0, %c0_0, %c0_1] : memref<2x8x32xf32, #tpu.memory_space<vmem>>, vector<2x8x32xf32>
    %c0_2 = arith.constant 0 : index
    %c0_3 = arith.constant 0 : index
    %c0_4 = arith.constant 0 : index
    %1 = vector.load %arg2[%c0_2, %c0_3, %c0_4] : memref<2x8x32xf32, #tpu.memory_space<vmem>>, vector<2x8x32xf32>
    %c0_5 = arith.constant 0 : index
    %c0_6 = arith.constant 0 : index
    %c0_7 = arith.constant 0 : index
    %2 = vector.load %arg3[%c0_5, %c0_6, %c0_7] : memref<2x8x32xf32, #tpu.memory_space<vmem>>, vector<2x8x32xf32>
    %3 = arith.truncf %0 : vector<2x8x32xf32> to vector<2x8x32xbf16>
    %4 = arith.truncf %1 : vector<2x8x32xf32> to vector<2x8x32xbf16>
    %5 = arith.truncf %2 : vector<2x8x32xf32> to vector<2x8x32xbf16>
    "tpu.trace_start"() <{level = 10 : i32, message = "bnd,bmd->bnm"}> : () -> ()
    %cst = arith.constant dense<0.000000e+00> : vector<2x8x8xf32>
    %6 = tpu.matmul %3, %4, %cst {dimension_numbers = #tpu.dot_dimension_numbers<[2], [2], [1], [1], [0, 0, 0, 1, 1, 1], [0], [0]>} : vector<2x8x32xbf16>, vector<2x8x32xbf16>, vector<2x8x8xf32> -> vector<2x8x8xf32>
    %cst_8 = arith.constant dense<0.000000e+00> : vector<2x8x8xf32>
    %7 = tpu.matmul %3, %5, %cst_8 {dimension_numbers = #tpu.dot_dimension_numbers<[2], [2], [1], [1], [0, 0, 0, 1, 1, 1], [0], [0]>} : vector<2x8x32xbf16>, vector<2x8x32xbf16>, vector<2x8x8xf32> -> vector<2x8x8xf32>
    "tpu.trace_stop"() : () -> ()
    %cst_9 = arith.constant dense<0xFF800000> : vector<2x8xf32>
    %8 = vector.multi_reduction <maximumf>, %6, %cst_9 [2] : vector<2x8x8xf32> to vector<2x8xf32>
    %cst_10 = arith.constant dense<0.000000e+00> : vector<2xf32>
    %9 = vector.multi_reduction <add>, %8, %cst_10 [1] : vector<2x8xf32> to vector<2xf32>
    %10 = vector.shape_cast %9 : vector<2xf32> to vector<2x1xf32>
    %cst_11 = arith.constant dense<0xFF800000> : vector<2x8xf32>
    %11 = vector.multi_reduction <maximumf>, %7, %cst_11 [2] : vector<2x8x8xf32> to vector<2x8xf32>
    %cst_12 = arith.constant dense<0.000000e+00> : vector<2xf32>
    %12 = vector.multi_reduction <add>, %11, %cst_12 [1] : vector<2x8xf32> to vector<2xf32>
    %13 = vector.shape_cast %12 : vector<2xf32> to vector<2x1xf32>
    %14 = arith.subf %13, %10 : vector<2x1xf32>
    %cst_13 = arith.constant 2.000000e-01 : f32
    %15 = vector.broadcast %cst_13 : f32 to vector<2x1xf32>
    %16 = arith.addf %14, %15 : vector<2x1xf32>
    %cst_14 = arith.constant 0.000000e+00 : f32
    %17 = vector.broadcast %cst_14 : f32 to vector<2x1xf32>
    %18 = arith.maximumf %16, %17 : vector<2x1xf32>
    %19 = vector.shape_cast %18 : vector<2x1xf32> to vector<2x1xf32>
    %20 = vector.broadcast %19 : vector<2x1xf32> to vector<2x128xf32>
    %c0_15 = arith.constant 0 : index
    %c0_16 = arith.constant 0 : index
    %21 = vector.load %arg4[%c0_15, %c0_16] : memref<2x128xf32, #tpu.memory_space<vmem>>, vector<2x128xf32>
    tpu.vector_store %arg4[%c0_15, %c0_16], %20 {strides = array<i32>} : memref<2x128xf32, #tpu.memory_space<vmem>>, vector<2x128xf32>,
    return
  }
  func.func @transform_0(%arg0: i32) -> (i32, i32, i32) {
    %c0_i32 = arith.constant 0 : i32
    %c0_i32_0 = arith.constant 0 : i32
    %c0_i32_1 = arith.constant 0 : i32
    return %arg0, %c0_i32, %c0_i32_0 : i32, i32, i32
  }
  func.func @transform_1(%arg0: i32) -> (i32, i32, i32) {
    %c0_i32 = arith.constant 0 : i32
    %c0_i32_0 = arith.constant 0 : i32
    %c0_i32_1 = arith.constant 0 : i32
    return %arg0, %c0_i32, %c0_i32_0 : i32, i32, i32
  }
  func.func @transform_2(%arg0: i32) -> (i32, i32, i32) {
    %c0_i32 = arith.constant 0 : i32
    %c0_i32_0 = arith.constant 0 : i32
    %c0_i32_1 = arith.constant 0 : i32
    return %arg0, %c0_i32, %c0_i32_0 : i32, i32, i32
  }
  func.func @transform_3(%arg0: i32) -> (i32, i32) {
    %c0_i32 = arith.constant 0 : i32
    %c0_i32_0 = arith.constant 0 : i32
    return %arg0, %c0_i32 : i32, i32
  }
}

</mosaic_0001>

<llo_original>
// kernel: tpu_custom_call.1
$region0: #{tpu_custom_call.1}
  #allocation0 [shape = 'u32[]', space=smem, size = 0x4, offset = 0x4, fixed_abs, tag = 'smem constant byte address 0x4 - core index']
  #allocation1 [shape = 'u32[144,128]{1,0:T(1,128)}', space=vmem, size = 0x12000, scoped, tag = 'internal scratch']
  %s0 = inlined_call_operand.hbm [shape: f32[2,8,32], index: 0, kind: input, shape index: {}]
  %s1 = inlined_call_operand.hbm [shape: f32[2,8,32], index: 1, kind: input, shape index: {}]
  %s2 = inlined_call_operand.hbm [shape: f32[2,8,32], index: 2, kind: input, shape index: {}]
  %s3 = inlined_call_operand.hbm [shape: f32[2,128], index: 3, kind: output, shape index: {}]
  %s4 = sld [smem:[#allocation0]]
  $region34: #{tpu_custom_call.1} parent=0
    _
  %s6 = ssub.s32 1, %s4
  %s7 = scalar_select 0, %s6, %s4
  $region1: #{tpu_custom_call.1} parent=0
    #allocation2 [shape = 'u8[8192]{0}', space=vmem, size = 0x2000, scoped, tag = 'input window, operand 0, single buffered']
    #allocation3 [shape = 's32[1]{0}', space=sflag, size = 0x4, scoped, tag = 'scoped memory for tpu_custom_call.1']
    #allocation4 [shape = 's32[1]{0}', space=sflag, size = 0x4, scoped, tag = 'scoped memory for tpu_custom_call.1']
    #allocation5 [shape = 'u8[8192]{0}', space=vmem, size = 0x2000, scoped, tag = 'input window, operand 1, single buffered']
    #allocation6 [shape = 's32[1]{0}', space=sflag, size = 0x4, scoped, tag = 'scoped memory for tpu_custom_call.1']
    #allocation7 [shape = 'u8[8192]{0}', space=vmem, size = 0x2000, scoped, tag = 'input window, operand 2, single buffered']
    #allocation8 [shape = 'u8[1024]{0}', space=vmem, size = 0x400, scoped, tag = 'output window, operand 0, single buffered']
    %8 = vsyncpa [#allocation3], 0
    %9 = vsyncpa [#allocation6], 0
    %10 = vsyncpa [#allocation4], 0
    // Predicated region
    $region2: #{tpu_custom_call.1} parent=1 // pred_check
      _
    $region3: #{tpu_custom_call.1} parent=1 // pred_check_branch
      %12 = sbr.rel (0) target = $region5
    $region4: #{tpu_custom_call.1} parent=1 // pred_region
      %s14 = ssub.s32 256, 256
      %15 = vsyncadd [#allocation3], %s14
      %s16 = sshll.u32 [#allocation2], 4
      %s17 = int_to_ptr.vmem [resolvable:$true] %s16
      %22 = dma.hbm_to_vmem [thread:$0]  %s0, 256, %s17, [#allocation3], 128, 128, 8
    $region5: #{tpu_custom_call.1} parent=1 // pred_fallthru
      _
    // Predicated region
    $region6: #{tpu_custom_call.1} parent=1 // pred_check
      _
    $region7: #{tpu_custom_call.1} parent=1 // pred_check_branch
      %24 = sbr.rel (0) target = $region9
    $region8: #{tpu_custom_call.1} parent=1 // pred_region
      %s26 = ssub.s32 256, 256
      %27 = vsyncadd [#allocation6], %s26
      %s28 = sshll.u32 [#allocation5], 4
      %s29 = int_to_ptr.vmem [resolvable:$true] %s28
      %34 = dma.hbm_to_vmem [thread:$0]  %s1, 256, %s29, [#allocation6], 128, 128, 8
    $region9: #{tpu_custom_call.1} parent=1 // pred_fallthru
      _
    // Predicated region
    $region10: #{tpu_custom_call.1} parent=1 // pred_check
      _
    $region11: #{tpu_custom_call.1} parent=1 // pred_check_branch
      %36 = sbr.rel (0) target = $region13
    $region12: #{tpu_custom_call.1} parent=1 // pred_region
      %s38 = ssub.s32 256, 256
      %39 = vsyncadd [#allocation6], %s38
      %s40 = sshll.u32 [#allocation7], 4
      %s41 = int_to_ptr.vmem [resolvable:$true] %s40
      %46 = dma.hbm_to_vmem [thread:$0]  %s2, 256, %s41, [#allocation6], 128, 128, 8
    $region13: #{tpu_custom_call.1} parent=1 // pred_fallthru
      _
    // Predicated region
    $region14: #{tpu_custom_call.1} parent=1 // pred_check
      _
    $region15: #{tpu_custom_call.1} parent=1 // pred_check_branch
      %48 = sbr.rel (0) target = $region17
    $region16: #{tpu_custom_call.1} parent=1 // pred_region
      %49 = dma.done [#allocation3], 256
    $region17: #{tpu_custom_call.1} parent=1 // pred_fallthru
      _
    // Predicated region
    $region18: #{tpu_custom_call.1} parent=1 // pred_check
      _
    $region19: #{tpu_custom_call.1} parent=1 // pred_check_branch
      %51 = sbr.rel (0) target = $region21
    $region20: #{tpu_custom_call.1} parent=1 // pred_region
      %52 = dma.done [#allocation6], 256
    $region21: #{tpu_custom_call.1} parent=1 // pred_fallthru
      _
    // Predicated region
    $region22: #{tpu_custom_call.1} parent=1 // pred_check
      _
    $region23: #{tpu_custom_call.1} parent=1 // pred_check_branch
      %54 = sbr.rel (0) target = $region25
    $region24: #{tpu_custom_call.1} parent=1 // pred_region
      %55 = dma.done [#allocation6], 256
    $region25: #{tpu_custom_call.1} parent=1 // pred_fallthru
      _
    %v57 = vld [vmem:[#allocation2] sm:$0xff]
    %v58 = vld [vmem:[#allocation2 + $0x8] sm:$0xff]
    %v59 = vld [vmem:[#allocation5] sm:$0xff]
    %v60 = vld [vmem:[#allocation5 + $0x8] sm:$0xff]
    %v61 = vld [vmem:[#allocation7] sm:$0xff]
    %v62 = vld [vmem:[#allocation7 + $0x8] sm:$0xff]
    %v63 = vpack.c.bf16 %v57, %v57
    %v64 = vpack.c.bf16 %v58, %v58
    %v65 = vpack.c.bf16 %v59, %v59
    %v66 = vpack.c.bf16 %v60, %v60
    %v67 = vpack.c.bf16 %v61, %v61
    %v68 = vpack.c.bf16 %v62, %v62
    %vm69 = vcmask 261120
    %v71 = vsel %vm69, %v63, 0
    %v74 = vsel %vm69, %v65, 0
    %76 = vmatprep.subr.bf16.mxu0 0
    %77 = vmatpush1.bf16.xpose.msra.mxu0 %v74
    %78 = vmatprep.subr.bf16.mxu0 0
    %79 = vmatpush1.bf16.xpose.msra.mxu0 0
    %80 = vmatprep.subr.bf16.mxu0 0
    %81 = vmatpush1.bf16.xpose.msra.mxu0 0
    %82 = vmatprep.subr.bf16.mxu0 0
    %83 = vmatpush1.bf16.xpose.msra.mxu0 0
    %84 = vmatprep.subr.bf16.mxu0 0
    %85 = vmatpush1.bf16.xpose.msra.mxu0 0
    %86 = vmatprep.subr.bf16.mxu0 0
    %87 = vmatpush1.bf16.xpose.msra.mxu0 0
    %88 = vmatprep.subr.bf16.mxu0 0
    %89 = vmatpush1.bf16.xpose.msra.mxu0 0
    %90 = vmatprep.subr.bf16.mxu0 0
    %91 = vmatpush1.bf16.xpose.msra.mxu0 0
    %92 = vmatprep.subr.bf16.mxu0 0
    %93 = vmatpush1.bf16.xpose.msra.mxu0 0
    %94 = vmatprep.subr.bf16.mxu0 0
    %95 = vmatpush1.bf16.xpose.msra.mxu0 0
    %96 = vmatprep.subr.bf16.mxu0 0
    %97 = vmatpush1.bf16.xpose.msra.mxu0 0
    %98 = vmatprep.subr.bf16.mxu0 0
    %99 = vmatpush1.bf16.xpose.msra.mxu0 0
    %100 = vmatprep.subr.bf16.mxu0 0
    %101 = vmatpush1.bf16.xpose.msra.mxu0 0
    %102 = vmatprep.subr.bf16.mxu0 0
    %103 = vmatpush1.bf16.xpose.msra.mxu0 0
    %104 = vmatprep.subr.bf16.mxu0 0
    %105 = vmatpush1.bf16.xpose.msra.mxu0 0
    %106 = vmatprep.subr.bf16.mxu0 0
    %107 = vmatpush1.bf16.xpose.msra.mxu0 0
    %108 = vmatprep.mubr.bf16.mxu0 0
    %109 = vmatmul.mubr.bf16.gmra.mrb[0].mxu0 %v71
    %v110 = vpop.f32.mrb[0].mxu0
    %v111 = vadd.f32 0.0, %v110
    %v112 = vpop.f32.mrb[0].mxu0
    %v113 = vpop.f32.mrb[0].mxu0
    %v114 = vpop.f32.mrb[0].mxu0
    %115 = vdwg.mxu0
    %v117 = vsel %vm69, %v64, 0
    %v120 = vsel %vm69, %v66, 0
    %122 = vmatprep.subr.bf16.mxu0 0
    %123 = vmatpush1.bf16.xpose.msra.mxu0 %v120
    %124 = vmatprep.subr.bf16.mxu0 0
    %125 = vmatpush1.bf16.xpose.msra.mxu0 0
    %126 = vmatprep.subr.bf16.mxu0 0
    %127 = vmatpush1.bf16.xpose.msra.mxu0 0
    %128 = vmatprep.subr.bf16.mxu0 0
    %129 = vmatpush1.bf16.xpose.msra.mxu0 0
    %130 = vmatprep.subr.bf16.mxu0 0
    %131 = vmatpush1.bf16.xpose.msra.mxu0 0
    %132 = vmatprep.subr.bf16.mxu0 0
    %133 = vmatpush1.bf16.xpose.msra.mxu0 0
    %134 = vmatprep.subr.bf16.mxu0 0
    %135 = vmatpush1.bf16.xpose.msra.mxu0 0
    %136 = vmatprep.subr.bf16.mxu0 0
    %137 = vmatpush1.bf16.xpose.msra.mxu0 0
    %138 = vmatprep.subr.bf16.mxu0 0
    %139 = vmatpush1.bf16.xpose.msra.mxu0 0
    %140 = vmatprep.subr.bf16.mxu0 0
    %141 = vmatpush1.bf16.xpose.msra.mxu0 0
    %142 = vmatprep.subr.bf16.mxu0 0
    %143 = vmatpush1.bf16.xpose.msra.mxu0 0
    %144 = vmatprep.subr.bf16.mxu0 0
    %145 = vmatpush1.bf16.xpose.msra.mxu0 0
    %146 = vmatprep.subr.bf16.mxu0 0
    %147 = vmatpush1.bf16.xpose.msra.mxu0 0
    %148 = vmatprep.subr.bf16.mxu0 0
    %149 = vmatpush1.bf16.xpose.msra.mxu0 0
    %150 = vmatprep.subr.bf16.mxu0 0
    %151 = vmatpush1.bf16.xpose.msra.mxu0 0
    %152 = vmatprep.subr.bf16.mxu0 0
    %153 = vmatpush1.bf16.xpose.msra.mxu0 0
    %154 = vmatprep.mubr.bf16.mxu0 0
    %155 = vmatmul.mubr.bf16.gmra.mrb[0].mxu0 %v117
    %v156 = vpop.f32.mrb[0].mxu0
    %v157 = vadd.f32 0.0, %v156
    %v158 = vpop.f32.mrb[0].mxu0
    %v159 = vpop.f32.mrb[0].mxu0
    %v160 = vpop.f32.mrb[0].mxu0
    %161 = vdwg.mxu0
    %v163 = vsel %vm69, %v67, 0
    %165 = vmatprep.subr.bf16.mxu0 0
    %166 = vmatpush1.bf16.xpose.msra.mxu0 %v163
    %167 = vmatprep.subr.bf16.mxu0 0
    %168 = vmatpush1.bf16.xpose.msra.mxu0 0
    %169 = vmatprep.subr.bf16.mxu0 0
    %170 = vmatpush1.bf16.xpose.msra.mxu0 0
    %171 = vmatprep.subr.bf16.mxu0 0
    %172 = vmatpush1.bf16.xpose.msra.mxu0 0
    %173 = vmatprep.subr.bf16.mxu0 0
    %174 = vmatpush1.bf16.xpose.msra.mxu0 0
    %175 = vmatprep.subr.bf16.mxu0 0
    %176 = vmatpush1.bf16.xpose.msra.mxu0 0
    %177 = vmatprep.subr.bf16.mxu0 0
    %178 = vmatpush1.bf16.xpose.msra.mxu0 0
    %179 = vmatprep.subr.bf16.mxu0 0
    %180 = vmatpush1.bf16.xpose.msra.mxu0 0
    %181 = vmatprep.subr.bf16.mxu0 0
    %182 = vmatpush1.bf16.xpose.msra.mxu0 0
    %183 = vmatprep.subr.bf16.mxu0 0
    %184 = vmatpush1.bf16.xpose.msra.mxu0 0
    %185 = vmatprep.subr.bf16.mxu0 0
    %186 = vmatpush1.bf16.xpose.msra.mxu0 0
    %187 = vmatprep.subr.bf16.mxu0 0
    %188 = vmatpush1.bf16.xpose.msra.mxu0 0
    %189 = vmatprep.subr.bf16.mxu0 0
    %190 = vmatpush1.bf16.xpose.msra.mxu0 0
    %191 = vmatprep.subr.bf16.mxu0 0
    %192 = vmatpush1.bf16.xpose.msra.mxu0 0
    %193 = vmatprep.subr.bf16.mxu0 0
    %194 = vmatpush1.bf16.xpose.msra.mxu0 0
    %195 = vmatprep.subr.bf16.mxu0 0
    %196 = vmatpush1.bf16.xpose.msra.mxu0 0
    %197 = vmatprep.mubr.bf16.mxu0 0
    %198 = vmatmul.mubr.bf16.gmra.mrb[0].mxu0 %v71
    %v199 = vpop.f32.mrb[0].mxu0
    %v200 = vadd.f32 0.0, %v199
    %v201 = vpop.f32.mrb[0].mxu0
    %v202 = vpop.f32.mrb[0].mxu0
    %v203 = vpop.f32.mrb[0].mxu0
    %204 = vdwg.mxu0
    %v206 = vsel %vm69, %v68, 0
    %208 = vmatprep.subr.bf16.mxu0 0
    %209 = vmatpush1.bf16.xpose.msra.mxu0 %v206
    %210 = vmatprep.subr.bf16.mxu0 0
    %211 = vmatpush1.bf16.xpose.msra.mxu0 0
    %212 = vmatprep.subr.bf16.mxu0 0
    %213 = vmatpush1.bf16.xpose.msra.mxu0 0
    %214 = vmatprep.subr.bf16.mxu0 0
    %215 = vmatpush1.bf16.xpose.msra.mxu0 0
    %216 = vmatprep.subr.bf16.mxu0 0
    %217 = vmatpush1.bf16.xpose.msra.mxu0 0
    %218 = vmatprep.subr.bf16.mxu0 0
    %219 = vmatpush1.bf16.xpose.msra.mxu0 0
    %220 = vmatprep.subr.bf16.mxu0 0
    %221 = vmatpush1.bf16.xpose.msra.mxu0 0
    %222 = vmatprep.subr.bf16.mxu0 0
    %223 = vmatpush1.bf16.xpose.msra.mxu0 0
    %224 = vmatprep.subr.bf16.mxu0 0
    %225 = vmatpush1.bf16.xpose.msra.mxu0 0
    %226 = vmatprep.subr.bf16.mxu0 0
    %227 = vmatpush1.bf16.xpose.msra.mxu0 0
    %228 = vmatprep.subr.bf16.mxu0 0
    %229 = vmatpush1.bf16.xpose.msra.mxu0 0
    %230 = vmatprep.subr.bf16.mxu0 0
    %231 = vmatpush1.bf16.xpose.msra.mxu0 0
    %232 = vmatprep.subr.bf16.mxu0 0
    %233 = vmatpush1.bf16.xpose.msra.mxu0 0
    %234 = vmatprep.subr.bf16.mxu0 0
    %235 = vmatpush1.bf16.xpose.msra.mxu0 0
    %236 = vmatprep.subr.bf16.mxu0 0
    %237 = vmatpush1.bf16.xpose.msra.mxu0 0
    %238 = vmatprep.subr.bf16.mxu0 0
    %239 = vmatpush1.bf16.xpose.msra.mxu0 0
    %240 = vmatprep.mubr.bf16.mxu0 0
    %241 = vmatmul.mubr.bf16.gmra.mrb[0].mxu0 %v117
    %v242 = vpop.f32.mrb[0].mxu0
    %v243 = vadd.f32 0.0, %v242
    %v244 = vpop.f32.mrb[0].mxu0
    %v245 = vpop.f32.mrb[0].mxu0
    %v246 = vpop.f32.mrb[0].mxu0
    %247 = vdwg.mxu0
    %vm248 = vcmask 64512
    %v249 = vsel %vm248, %v111, -inf
    %250 = vmax.xlane.f32.xlu0 %v249
    %v251 = vpop.xlane.xlu0 %250
    %v252 = vsel %vm248, %v157, -inf
    %253 = vmax.xlane.f32.xlu0 %v252
    %v254 = vpop.xlane.xlu0 %253
    %v257 = vlaneseq
    %v258 = vand.u32 %v257, 127
    %v259 = vlaneseq
    %v260 = vshrl.u32 %v259, 7
    %v261 = vsub.s32 %v258, %v260
    %v262 = vrot.slane %v251, %v261
    %v263 = vlaneseq
    %v264 = vshrl.u32 %v263, 7
    %v265 = vsub.s32 %v258, %v264
    %v266 = vrot.slane %v254, %v265
    %vm267 = vcmask 1041409
    %v268 = vsel %vm267, %v266, %v262
    %vm270 = vcmask 58368
    %v271 = vsel %vm270, %v268, 0.0
    %272 = vadd.xlane.f32.xlu0 %v271
    %v273 = vpop.xlane.xlu0 %272
    %v274 = vsel %vm248, %v200, -inf
    %275 = vmax.xlane.f32.xlu0 %v274
    %v276 = vpop.xlane.xlu0 %275
    %v277 = vsel %vm248, %v243, -inf
    %278 = vmax.xlane.f32.xlu0 %v277
    %v279 = vpop.xlane.xlu0 %278
    %v282 = vlaneseq
    %v283 = vshrl.u32 %v282, 7
    %v284 = vsub.s32 %v258, %v283
    %v285 = vrot.slane %v276, %v284
    %v286 = vlaneseq
    %v287 = vshrl.u32 %v286, 7
    %v288 = vsub.s32 %v258, %v287
    %v289 = vrot.slane %v279, %v288
    %v290 = vsel %vm267, %v289, %v285
    %v292 = vsel %vm270, %v290, 0.0
    %293 = vadd.xlane.f32.xlu0 %v292
    %v294 = vpop.xlane.xlu0 %293
    %v295 = vsub.f32 %v294, %v273
    %v296 = vadd.f32 %v295, 0.2
    %v297 = vmax.f32 %v296, 0.0
    %298 = vst [vmem:[#allocation8] sm:$0x3] %v297
    // Predicated region
    $region26: #{tpu_custom_call.1} parent=1 // pred_check
      _
    $region27: #{tpu_custom_call.1} parent=1 // pred_check_branch
      %300 = sbr.rel (0) target = $region29
    $region28: #{tpu_custom_call.1} parent=1 // pred_region
      %s302 = ssub.s32 32, 32
      %303 = vsyncadd [#allocation4], %s302
      %s305 = sshll.u32 [#allocation8], 4
      %s306 = int_to_ptr.vmem [resolvable:$true] %s305
      %308 = dma.vmem_to_hbm [thread:$0]  %s306, 32, %s3, [#allocation4]
    $region29: #{tpu_custom_call.1} parent=1 // pred_fallthru
      _
    // Predicated region
    $region30: #{tpu_custom_call.1} parent=1 // pred_check
      _
    $region31: #{tpu_custom_call.1} parent=1 // pred_check_branch
      %310 = sbr.rel (0) target = $region33
    $region32: #{tpu_custom_call.1} parent=1 // pred_region
      %311 = dma.done [#allocation4], 32
    $region33: #{tpu_custom_call.1} parent=1 // pred_fallthru
      _
    %312 = vsyncpa [#allocation3], 1
    %313 = vsyncpa [#allocation6], 1
    %314 = vsyncpa [#allocation4], 1

</llo_original>
